<compile_context>
chip_gen: v5e
topology: v5e:2x2
jax: 0.10.0
libtpu: 0.0.40
codegen_flags: <defaults>
</compile_context>

<pallas_src>
import functools

import jax
import jax.numpy as jnp
import numpy as np
from jax.experimental import pallas as pl
from jax.experimental.pallas import tpu as pltpu


def _temporal_block_kernel(x_ref, mask_ref, w1_ref, b1_ref, a1_ref,
                           w2_ref, b2_ref, a2_ref, *rest,
                           kernel_size, dilation, padding,
                           compute_dtype, ew_dtype, has_downsample):
    if has_downsample:
        wd_ref, bd_ref, out_ref = rest
    else:
        (out_ref,) = rest

    x = x_ref[...]                       # (Ci, TW); f32 (identity path) or compute dtype
    TW = x.shape[-1]
    x_c = x.astype(compute_dtype)
    mask = mask_ref[...]                 # (1, TW) in ew_dtype: 1 on real cols, 0 on pad cols

    def stacked_taps(v):
        # v: (C, TW), compute dtype, zeros in every per-segment padding column.
        # Returns (K*C, TW) where row block k, column j holds
        # v[:, j + k*dilation - padding] for every interior column j.
        # Lane rotation runs on the XLU (idle relative to VALU/vld/vst here);
        # block-edge wraparound only pollutes padding columns, which are
        # re-masked (h) or sliced away by the wrapper (output).
        if kernel_size == 1:
            return v
        taps = []
        for k in range(kernel_size):
            s = (padding - k * dilation) % TW
            taps.append(pltpu.roll(v, shift=s, axis=1) if s else v)
        return jnp.concatenate(taps, axis=0)

    # ---- conv1 (dilated): one MXU matmul over the K stacked taps ----
    h = jnp.dot(w1_ref[...], stacked_taps(x_c), preferred_element_type=jnp.float32)
    h = h.astype(ew_dtype)                               # bf16 elementwise on v6e/v7x
    h = h + b1_ref[...].astype(ew_dtype)
    a1 = a1_ref[0, 0].astype(ew_dtype)
    h = jnp.where(h > 0, h, a1 * h)                      # PReLU (single shared weight)
    h = h * mask                                         # zero pad columns for conv2

    # ---- conv2 (dilated) ----
    o = jnp.dot(w2_ref[...], stacked_taps(h.astype(compute_dtype)),
                preferred_element_type=jnp.float32)
    o = o + b2_ref[...]
    a2 = a2_ref[0, 0]
    o = jnp.where(o > 0, o, a2 * o)                      # PReLU, f32 output path

    # ---- residual branch ----
    if has_downsample:
        res = jnp.dot(wd_ref[...], x_c, preferred_element_type=jnp.float32) + bd_ref[...]
    else:
        res = x.astype(jnp.float32)                      # exact f32 identity skip (x is f32)

    # Padding columns carry don't-care values; the wrapper slices them away.
    out_ref[...] = (o + res).astype(out_ref.dtype)


def _round_up(v, m):
    return (v + m - 1) // m * m


def _elementwise_dtype_default(compute_dtype):
    # v6e/v7x VALUs are bf16-native; v2-v5 chips are not -> keep f32 there.
    if np.dtype(compute_dtype).itemsize == 4:
        return jnp.float32
    try:
        kind = jax.devices()[0].device_kind.lower()
        if any(tag in kind for tag in ("v2", "v3", "v4", "v5")):
            return jnp.float32
    except Exception:
        pass
    return compute_dtype


def temporal_block(x, params, *, kernel_size, dilation,
                   compute_dtype=jnp.bfloat16, elementwise_dtype=None,
                   batch_tile=None, max_block_lanes=32768,
                   vmem_block_budget_bytes=24 * 1024 * 1024):
    """x: (N, C_in, L) float32. Returns (N, C_out, L) float32."""
    N, C_in, L = x.shape
    w1, b1, a1, w2, b2, a2, wd, bd = params
    K, H, _ = w1.shape                       # weights stored as (K, out_ch, in_ch)
    _, C_out, _ = w2.shape
    assert K == kernel_size

    # PyTorch's padding = d*(K-1)//2 floors; when d*(K-1) is odd the conv output
    # is shorter than the input and the residual add fails in PyTorch as well.
    assert (kernel_size - 1) * dilation % 2 == 0, \
        "dilation*(kernel_size-1) must be even for 'same'-length output"
    padding = dilation * (kernel_size - 1) // 2
    Lp = L + 2 * padding

    has_downsample = wd is not None
    if not has_downsample:
        assert C_in == C_out

    ew_dtype = elementwise_dtype or _elementwise_dtype_default(compute_dtype)

    # Pad channel counts to sublane-packing multiples (8 rows f32, 16 bf16) so
    # MXU tiles and the in-kernel sublane concats stay aligned.
    cdt_bytes = np.dtype(compute_dtype).itemsize
    ew_bytes = np.dtype(ew_dtype).itemsize
    sub = 8 if cdt_bytes == 4 else 16
    Ci, Hh, Co = _round_up(C_in, sub), _round_up(H, sub), _round_up(C_out, sub)

    # Identity residual: keep x in f32 so the skip connection is exact.
    x_kernel_dtype = compute_dtype if has_downsample else jnp.float32
    x_bytes = np.dtype(x_kernel_dtype).itemsize

    # Rough per-lane VMEM cost of one block (double-buffered I/O + temporaries).
    per_lane = (2 * Ci * x_bytes            # x block (double buffered)
                + 2 * Co * 4                # f32 output block (double buffered)
                + 2 * ew_bytes              # interior mask block
                + K * Ci * cdt_bytes        # conv1 stacked taps
                + K * Hh * cdt_bytes        # conv2 stacked taps
                + Hh * (4 + ew_bytes + cdt_bytes)   # conv1 acc + elementwise + cast
                + 2 * Co * 4)               # conv2 acc + residual

    # Batch tile: each grid step handles `batch_tile` whole padded segments.
    # Pick the LARGEST tile that is lane-legal (multiple of 128 lanes, or the
    # whole folded axis) and fits the VMEM budget; prefer >=2 grid steps so the
    # "parallel" axis can split across v7x's two TensorCores.
    if batch_tile is None:
        divs = [d for d in range(1, N + 1) if N % d == 0]
        legal = [d for d in divs if (d * Lp) % 128 == 0 or d == N]
        fits = [d for d in legal
                if d * Lp <= max_block_lanes
                and per_lane * d * Lp <= vmem_block_budget_bytes]
        if fits:
            multi = [d for d in fits if N // d >= 2]
            batch_tile = max(multi) if multi else max(fits)
        elif legal:
            batch_tile = min(legal)
        else:
            batch_tile = N
    assert N % batch_tile == 0
    assert batch_tile == N or (batch_tile * Lp) % 128 == 0, \
        "batch_tile * (L + 2*padding) must be a multiple of 128 lanes"
    TW = batch_tile * Lp
    grid = (N // batch_tile,)

    # Activations: NCL -> channel-major folded slab (Ci, N*Lp) with per-segment
    # zero padding.  The transpose/pad/reshape fuse into one XLA copy.
    # TODO(synk): for stacked TemporalBlocks (QuantGAN TCN) keep the (C, N*Lp)
    # channel-major folded layout between blocks instead of round-tripping
    # through NCL here; on this memory-bound kernel the pre/post layout passes
    # roughly double total HBM traffic.
    xs = jnp.transpose(x, (1, 0, 2))                               # (C_in, N, L)
    xs = jnp.pad(xs, ((0, Ci - C_in), (0, 0), (padding, padding)))
    xs = xs.reshape(Ci, N * Lp).astype(x_kernel_dtype)

    # Precomputed interior (non-padding-column) mask, identical for every block.
    pos = np.arange(TW) % Lp
    interior = ((pos >= padding) & (pos < padding + L)).astype(np.float32)
    mask = jnp.asarray(interior.reshape(1, TW), dtype=ew_dtype)

    # Weights: stack the K taps along the MXU contraction axis.
    def stack_taps_w(w, out_p, in_p):
        k, o, i = w.shape
        w = jnp.pad(w, ((0, 0), (0, out_p - o), (0, in_p - i)))
        return jnp.transpose(w, (1, 0, 2)).reshape(out_p, k * in_p).astype(compute_dtype)

    w1s = stack_taps_w(w1, Hh, Ci)                                 # (Hh, K*Ci)
    w2s = stack_taps_w(w2, Co, Hh)                                 # (Co, K*Hh)
    b1p = jnp.pad(b1, (0, Hh - H)).reshape(Hh, 1).astype(jnp.float32)
    b2p = jnp.pad(b2, (0, Co - C_out)).reshape(Co, 1).astype(jnp.float32)
    a1s = jnp.asarray(a1, jnp.float32).reshape(1, 1)
    a2s = jnp.asarray(a2, jnp.float32).reshape(1, 1)

    in_specs = [
        pl.BlockSpec((Ci, TW), lambda g: (0, g)),                  # x slab block
        pl.BlockSpec((1, TW), lambda g: (0, 0)),                   # interior mask
        pl.BlockSpec((Hh, kernel_size * Ci), lambda g: (0, 0)),    # w1 stacked
        pl.BlockSpec((Hh, 1), lambda g: (0, 0)),                   # b1
        pl.BlockSpec(memory_space=pltpu.MemorySpace.SMEM),         # a1 (PReLU)
        pl.BlockSpec((Co, kernel_size * Hh), lambda g: (0, 0)),    # w2 stacked
        pl.BlockSpec((Co, 1), lambda g: (0, 0)),                   # b2
        pl.BlockSpec(memory_space=pltpu.MemorySpace.SMEM),         # a2 (PReLU)
    ]
    args = [xs, mask, w1s, b1p, a1s, w2s, b2p, a2s]
    if has_downsample:
        wds = jnp.pad(wd, ((0, Co - C_out), (0, Ci - C_in))).astype(compute_dtype)
        bdp = jnp.pad(bd, (0, Co - C_out)).reshape(Co, 1).astype(jnp.float32)
        in_specs += [pl.BlockSpec((Co, Ci), lambda g: (0, 0)),     # downsample w
                     pl.BlockSpec((Co, 1), lambda g: (0, 0))]      # downsample b
        args += [wds, bdp]

    # Raise the scoped-VMEM limit (v5e defaults to 16 MiB) but stay well under
    # v7x's 64 MiB physical VMEM; the tile was budgeted far below this anyway.
    weight_bytes = 2 * cdt_bytes * (Hh * K * Ci + Co * K * Hh + Co * Ci) + 12 * Co
    est_block_bytes = per_lane * TW + weight_bytes
    vmem_limit = int(min(56 * 2**20, max(32 * 2**20, 2 * est_block_bytes)))

    kernel = functools.partial(
        _temporal_block_kernel,
        kernel_size=kernel_size, dilation=dilation, padding=padding,
        compute_dtype=compute_dtype, ew_dtype=ew_dtype,
        has_downsample=has_downsample)

    out = pl.pallas_call(
        kernel,
        out_shape=jax.ShapeDtypeStruct((Co, N * Lp), jnp.float32),
        grid=grid,
        in_specs=in_specs,
        out_specs=pl.BlockSpec((Co, TW), lambda g: (0, g)),
        compiler_params=pltpu.CompilerParams(
            dimension_semantics=("parallel",),                     # megacore on v7x
            vmem_limit_bytes=vmem_limit),
    )(*args)

    # (Co, N*Lp) -> (N, C_out, L): drop channel pad + per-segment length pad.
    out = out.reshape(Co, N, Lp)[:C_out, :, padding:padding + L]
    return jnp.transpose(out, (1, 0, 2))


def init_params(key, n_inputs, n_hidden, n_outputs, kernel_size):
    """Matches TemporalBlock.__init__: conv weights ~ N(0, 0.01); conv biases keep
       the PyTorch Conv1d default uniform init; PReLU weight = 0.25 (one shared
       parameter, nn.PReLU() default).  Conv weights stored as (K, out_ch, in_ch)."""
    ks = jax.random.split(key, 6)
    w1 = 0.01 * jax.random.normal(ks[0], (kernel_size, n_hidden, n_inputs), jnp.float32)
    w2 = 0.01 * jax.random.normal(ks[1], (kernel_size, n_outputs, n_hidden), jnp.float32)
    bound1 = 1.0 / np.sqrt(n_inputs * kernel_size)
    bound2 = 1.0 / np.sqrt(n_hidden * kernel_size)
    b1 = jax.random.uniform(ks[2], (n_hidden,), jnp.float32, -bound1, bound1)
    b2 = jax.random.uniform(ks[3], (n_outputs,), jnp.float32, -bound2, bound2)
    a1 = jnp.full((1, 1), 0.25, jnp.float32)
    a2 = jnp.full((1, 1), 0.25, jnp.float32)
    if n_inputs != n_outputs:
        wd = 0.01 * jax.random.normal(ks[4], (n_outputs, n_inputs), jnp.float32)
        boundd = 1.0 / np.sqrt(n_inputs)
        bd = jax.random.uniform(ks[5], (n_outputs,), jnp.float32, -boundd, boundd)
    else:
        wd, bd = None, None                     # downsample is None in the module
    return (w1, b1, a1, w2, b2, a2, wd, bd)


def _ref_forward(x, params, *, kernel_size, dilation):
    """Pure-JAX reference mirroring the PyTorch forward (for verification)."""
    w1, b1, a1, w2, b2, a2, wd, bd = params
    padding = dilation * (kernel_size - 1) // 2

    def conv1d(v, w_oik, b, dil, pad):
        out = jax.lax.conv_general_dilated(
            v, w_oik, window_strides=(1,), padding=[(pad, pad)],
            rhs_dilation=(dil,), dimension_numbers=("NCH", "OIH", "NCH"))
        return out + b[None, :, None]

    def prelu(v, a):
        return jnp.where(v > 0, v, a[0, 0] * v)

    h = prelu(conv1d(x, jnp.transpose(w1, (1, 2, 0)), b1, dilation, padding), a1)
    o = prelu(conv1d(h, jnp.transpose(w2, (1, 2, 0)), b2, dilation, padding), a2)
    res = x if wd is None else conv1d(x, wd[:, :, None], bd, 1, 0)
    return o + res


if __name__ == "__main__":
    key = jax.random.PRNGKey(0)
    kx, kp1, kp2 = jax.random.split(key, 3)

    # Small, lane-friendly shapes: Lp = L + 2*padding = 128, channels multiples
    # of 8.  N=8 exercises the auto tile selection (largest divisor with a
    # >=2-step grid -> batch_tile=4, TW=512 lanes, grid=(2,)).
    N, L, kernel_size, dilation = 8, 124, 3, 2          # padding = 2

    # --- downsample-residual path (n_inputs != n_outputs) ---
    n_inputs, n_hidden, n_outputs = 8, 16, 24
    x = jax.random.normal(kx, (N, n_inputs, L), jnp.float32)
    params = init_params(kp1, n_inputs, n_hidden, n_outputs, kernel_size)
    ref = _ref_forward(x, params, kernel_size=kernel_size, dilation=dilation)

    # float32 compute path: tight structural/numerical check.
    out_f32 = temporal_block(x, params, kernel_size=kernel_size, dilation=dilation,
                             compute_dtype=jnp.float32)
    out_f32 = jax.block_until_ready(out_f32)
    assert out_f32.shape == (N, n_outputs, L)
    np.testing.assert_allclose(np.asarray(out_f32), np.asarray(ref),
                               rtol=1e-4, atol=1e-4)

    # bf16 compute / f32 accumulate path (the performance configuration).
    out_bf16 = temporal_block(x, params, kernel_size=kernel_size, dilation=dilation,
                              compute_dtype=jnp.bfloat16)
    out_bf16 = jax.block_until_ready(out_bf16)
    assert out_bf16.shape == (N, n_outputs, L)
    np.testing.assert_allclose(np.asarray(out_bf16), np.asarray(ref),
                               rtol=5e-2, atol=5e-3)

    # --- identity-residual path (n_inputs == n_outputs -> exact f32 skip) ---
    n_inputs2, n_hidden2, n_outputs2 = 8, 16, 8
    params2 = init_params(kp2, n_inputs2, n_hidden2, n_outputs2, kernel_size)
    ref2 = _ref_forward(x, params2, kernel_size=kernel_size, dilation=dilation)
    out_id = temporal_block(x, params2, kernel_size=kernel_size, dilation=dilation,
                            compute_dtype=jnp.bfloat16)
    out_id = jax.block_until_ready(out_id)
    assert out_id.shape == (N, n_outputs2, L)
    np.testing.assert_allclose(np.asarray(out_id), np.asarray(ref2),
                               rtol=5e-2, atol=5e-3)

    print("KERNEL_OK")
</pallas_src>

<mosaic_0001>
module attributes {stable_mosaic.version = 11 : i64} {
  func.func @_temporal_block_kernel(%arg0: i32, %arg1: memref<8x512xf32, #tpu.memory_space<vmem>>, %arg2: memref<1x512xf32, #tpu.memory_space<vmem>>, %arg3: memref<16x24xf32, #tpu.memory_space<vmem>>, %arg4: memref<16x1xf32, #tpu.memory_space<vmem>>, %arg5: memref<1x1xf32, #tpu.memory_space<smem>>, %arg6: memref<24x48xf32, #tpu.memory_space<vmem>>, %arg7: memref<24x1xf32, #tpu.memory_space<vmem>>, %arg8: memref<1x1xf32, #tpu.memory_space<smem>>, %arg9: memref<24x8xf32, #tpu.memory_space<vmem>>, %arg10: memref<24x1xf32, #tpu.memory_space<vmem>>, %arg11: memref<24x512xf32, #tpu.memory_space<vmem>>) attributes {dimension_semantics = [#tpu.dimension_semantics<parallel>], iteration_bounds = array<i64: 2>, scalar_prefetch = 0 : i64, scratch_operands = 0 : i64, tpu.core_type = #tpu.core_type<tc>, window_params = [{transform_indices = @transform_0, window_bounds = array<i64: 8, 512>}, {pipeline_mode = #tpu.pipeline_mode<synchronous>, transform_indices = @transform_1, window_bounds = array<i64: 1, 512>}, {pipeline_mode = #tpu.pipeline_mode<synchronous>, transform_indices = @transform_2, window_bounds = array<i64: 16, 24>}, {pipeline_mode = #tpu.pipeline_mode<synchronous>, transform_indices = @transform_3, window_bounds = array<i64: 16, 1>}, {transform_indices = @transform_4, window_bounds = array<i64: 1, 1>}, {pipeline_mode = #tpu.pipeline_mode<synchronous>, transform_indices = @transform_5, window_bounds = array<i64: 24, 48>}, {pipeline_mode = #tpu.pipeline_mode<synchronous>, transform_indices = @transform_6, window_bounds = array<i64: 24, 1>}, {transform_indices = @transform_7, window_bounds = array<i64: 1, 1>}, {pipeline_mode = #tpu.pipeline_mode<synchronous>, transform_indices = @transform_8, window_bounds = array<i64: 24, 8>}, {pipeline_mode = #tpu.pipeline_mode<synchronous>, transform_indices = @transform_9, window_bounds = array<i64: 24, 1>}, {transform_indices = @transform_10, window_bounds = array<i64: 24, 512>}]} {
    %c0 = arith.constant 0 : index
    %c0_0 = arith.constant 0 : index
    %0 = vector.load %arg1[%c0, %c0_0] : memref<8x512xf32, #tpu.memory_space<vmem>>, vector<8x512xf32>
    %c0_1 = arith.constant 0 : index
    %c0_2 = arith.constant 0 : index
    %1 = vector.load %arg2[%c0_1, %c0_2] : memref<1x512xf32, #tpu.memory_space<vmem>>, vector<1x512xf32>
    %c0_3 = arith.constant 0 : index
    %c0_4 = arith.constant 0 : index
    %2 = vector.load %arg3[%c0_3, %c0_4] : memref<16x24xf32, #tpu.memory_space<vmem>>, vector<16x24xf32>
    %c2_i32 = arith.constant 2 : i32
    %3 = tpu.dynamic_rotate %0 by %c2_i32 dim 1 : vector<8x512xf32>, i32 -> vector<8x512xf32>
    %c510_i32 = arith.constant 510 : i32
    %4 = tpu.dynamic_rotate %0 by %c510_i32 dim 1 : vector<8x512xf32>, i32 -> vector<8x512xf32>
    %5 = tpu.concatenate %3, %0, %4 in 0 : vector<8x512xf32>, vector<8x512xf32>, vector<8x512xf32> -> vector<24x512xf32>
    %cst = arith.constant dense<0.000000e+00> : vector<16x512xf32>
    %6 = tpu.matmul %2, %5, %cst {dimension_numbers = #tpu.dot_dimension_numbers<[1], [0], [0], [1], [0, 0, 1, 1], [], []>} : vector<16x24xf32>, vector<24x512xf32>, vector<16x512xf32> -> vector<16x512xf32>
    %c0_5 = arith.constant 0 : index
    %c0_6 = arith.constant 0 : index
    %7 = vector.load %arg4[%c0_5, %c0_6] : memref<16x1xf32, #tpu.memory_space<vmem>>, vector<16x1xf32>
    %8 = vector.broadcast %7 : vector<16x1xf32> to vector<16x512xf32>
    %9 = arith.addf %6, %8 : vector<16x512xf32>
    %c0_7 = arith.constant 0 : index
    %c0_8 = arith.constant 0 : index
    %10 = memref.load %arg5[%c0_7, %c0_8] : memref<1x1xf32, #tpu.memory_space<smem>>
    %cst_9 = arith.constant 0.000000e+00 : f32
    %11 = vector.broadcast %cst_9 : f32 to vector<16x512xf32>
    %12 = arith.cmpf ogt, %9, %11 : vector<16x512xf32>
    %13 = vector.broadcast %10 : f32 to vector<16x512xf32>
    %14 = arith.mulf %13, %9 : vector<16x512xf32>
    %15 = arith.select %12, %9, %14 : vector<16x512xi1>, vector<16x512xf32>
    %16 = vector.broadcast %1 : vector<1x512xf32> to vector<16x512xf32>
    %17 = arith.mulf %15, %16 : vector<16x512xf32>
    %c0_10 = arith.constant 0 : index
    %c0_11 = arith.constant 0 : index
    %18 = vector.load %arg6[%c0_10, %c0_11] : memref<24x48xf32, #tpu.memory_space<vmem>>, vector<24x48xf32>
    %c2_i32_12 = arith.constant 2 : i32
    %19 = tpu.dynamic_rotate %17 by %c2_i32_12 dim 1 : vector<16x512xf32>, i32 -> vector<16x512xf32>
    %c510_i32_13 = arith.constant 510 : i32
    %20 = tpu.dynamic_rotate %17 by %c510_i32_13 dim 1 : vector<16x512xf32>, i32 -> vector<16x512xf32>
    %21 = tpu.concatenate %19, %17, %20 in 0 : vector<16x512xf32>, vector<16x512xf32>, vector<16x512xf32> -> vector<48x512xf32>
    %cst_14 = arith.constant dense<0.000000e+00> : vector<24x512xf32>
    %22 = tpu.matmul %18, %21, %cst_14 {dimension_numbers = #tpu.dot_dimension_numbers<[1], [0], [0], [1], [0, 0, 1, 1], [], []>} : vector<24x48xf32>, vector<48x512xf32>, vector<24x512xf32> -> vector<24x512xf32>
    %c0_15 = arith.constant 0 : index
    %c0_16 = arith.constant 0 : index
    %23 = vector.load %arg7[%c0_15, %c0_16] : memref<24x1xf32, #tpu.memory_space<vmem>>, vector<24x1xf32>
    %24 = vector.broadcast %23 : vector<24x1xf32> to vector<24x512xf32>
    %25 = arith.addf %22, %24 : vector<24x512xf32>
    %c0_17 = arith.constant 0 : index
    %c0_18 = arith.constant 0 : index
    %26 = memref.load %arg8[%c0_17, %c0_18] : memref<1x1xf32, #tpu.memory_space<smem>>
    %cst_19 = arith.constant 0.000000e+00 : f32
    %27 = vector.broadcast %cst_19 : f32 to vector<24x512xf32>
    %28 = arith.cmpf ogt, %25, %27 : vector<24x512xf32>
    %29 = vector.broadcast %26 : f32 to vector<24x512xf32>
    %30 = arith.mulf %29, %25 : vector<24x512xf32>
    %31 = arith.select %28, %25, %30 : vector<24x512xi1>, vector<24x512xf32>
    %c0_20 = arith.constant 0 : index
    %c0_21 = arith.constant 0 : index
    %32 = vector.load %arg9[%c0_20, %c0_21] : memref<24x8xf32, #tpu.memory_space<vmem>>, vector<24x8xf32>
    %cst_22 = arith.constant dense<0.000000e+00> : vector<24x512xf32>
    %33 = tpu.matmul %32, %0, %cst_22 {dimension_numbers = #tpu.dot_dimension_numbers<[1], [0], [0], [1], [0, 0, 1, 1], [], []>} : vector<24x8xf32>, vector<8x512xf32>, vector<24x512xf32> -> vector<24x512xf32>
    %c0_23 = arith.constant 0 : index
    %c0_24 = arith.constant 0 : index
    %34 = vector.load %arg10[%c0_23, %c0_24] : memref<24x1xf32, #tpu.memory_space<vmem>>, vector<24x1xf32>
    %35 = vector.broadcast %34 : vector<24x1xf32> to vector<24x512xf32>
    %36 = arith.addf %33, %35 : vector<24x512xf32>
    %37 = arith.addf %31, %36 : vector<24x512xf32>
    %c0_25 = arith.constant 0 : index
    %c0_26 = arith.constant 0 : index
    %38 = vector.load %arg11[%c0_25, %c0_26] : memref<24x512xf32, #tpu.memory_space<vmem>>, vector<24x512xf32>
    tpu.vector_store %arg11[%c0_25, %c0_26], %37 {strides = array<i32>} : memref<24x512xf32, #tpu.memory_space<vmem>>, vector<24x512xf32>,
    return
  }
  func.func @transform_0(%arg0: i32) -> (i32, i32) {
    %c0_i32 = arith.constant 0 : i32
    %c0_i32_0 = arith.constant 0 : i32
    return %c0_i32, %arg0 : i32, i32
  }
  func.func @transform_1(%arg0: i32) -> (i32, i32) {
    %c0_i32 = arith.constant 0 : i32
    %c0_i32_0 = arith.constant 0 : i32
    %c0_i32_1 = arith.constant 0 : i32
    return %c0_i32, %c0_i32_0 : i32, i32
  }
  func.func @transform_2(%arg0: i32) -> (i32, i32) {
    %c0_i32 = arith.constant 0 : i32
    %c0_i32_0 = arith.constant 0 : i32
    %c0_i32_1 = arith.constant 0 : i32
    return %c0_i32, %c0_i32_0 : i32, i32
  }
  func.func @transform_3(%arg0: i32) -> (i32, i32) {
    %c0_i32 = arith.constant 0 : i32
    %c0_i32_0 = arith.constant 0 : i32
    %c0_i32_1 = arith.constant 0 : i32
    return %c0_i32, %c0_i32_0 : i32, i32
  }
  func.func @transform_4(%arg0: i32) -> (i32, i32) {
    %c0_i32 = arith.constant 0 : i32
    %c0_i32_0 = arith.constant 0 : i32
    %c0_i32_1 = arith.constant 0 : i32
    return %c0_i32, %c0_i32_0 : i32, i32
  }
  func.func @transform_5(%arg0: i32) -> (i32, i32) {
    %c0_i32 = arith.constant 0 : i32
    %c0_i32_0 = arith.constant 0 : i32
    %c0_i32_1 = arith.constant 0 : i32
    return %c0_i32, %c0_i32_0 : i32, i32
  }
  func.func @transform_6(%arg0: i32) -> (i32, i32) {
    %c0_i32 = arith.constant 0 : i32
    %c0_i32_0 = arith.constant 0 : i32
    %c0_i32_1 = arith.constant 0 : i32
    return %c0_i32, %c0_i32_0 : i32, i32
  }
  func.func @transform_7(%arg0: i32) -> (i32, i32) {
    %c0_i32 = arith.constant 0 : i32
    %c0_i32_0 = arith.constant 0 : i32
    %c0_i32_1 = arith.constant 0 : i32
    return %c0_i32, %c0_i32_0 : i32, i32
  }
  func.func @transform_8(%arg0: i32) -> (i32, i32) {
    %c0_i32 = arith.constant 0 : i32
    %c0_i32_0 = arith.constant 0 : i32
    %c0_i32_1 = arith.constant 0 : i32
    return %c0_i32, %c0_i32_0 : i32, i32
  }
  func.func @transform_9(%arg0: i32) -> (i32, i32) {
    %c0_i32 = arith.constant 0 : i32
    %c0_i32_0 = arith.constant 0 : i32
    %c0_i32_1 = arith.constant 0 : i32
    return %c0_i32, %c0_i32_0 : i32, i32
  }
  func.func @transform_10(%arg0: i32) -> (i32, i32) {
    %c0_i32 = arith.constant 0 : i32
    %c0_i32_0 = arith.constant 0 : i32
    return %c0_i32, %arg0 : i32, i32
  }
}

</mosaic_0001>

<llo_original>
// kernel: tpu_custom_call.1
$region0: #{tpu_custom_call.1}
  #allocation0 [shape = 'u32[]', space=smem, size = 0x4, offset = 0x4, fixed_abs, tag = 'smem constant byte address 0x4 - core index']
  #allocation1 [shape = 'u32[72,128]{1,0:T(1,128)}', space=vmem, size = 0x9000, scoped, tag = 'internal scratch']
  #allocation2 [shape = 'f32[1,1]{1,0:T(1,128)S(6)}', space=smem, size = 0x200, scoped, tag = 'scoped memory for tpu_custom_call.1']
  #allocation3 [shape = 'f32[1,1]{1,0:T(1,128)S(6)}', space=smem, size = 0x200, scoped, tag = 'scoped memory for tpu_custom_call.1']
  %s0 = inlined_call_operand.hbm [shape: f32[8,1024], index: 0, kind: input, shape index: {}]
  %s1 = inlined_call_operand.vmem [shape: f32[1,512], index: 1, kind: input, shape index: {}]
  %s2 = inlined_call_operand.vmem [shape: f32[16,24], index: 2, kind: input, shape index: {}]
  %s3 = inlined_call_operand.vmem [shape: f32[16,1], index: 3, kind: input, shape index: {}]
  %s4 = inlined_call_operand.<no memory space> [shape: f32[1,1], index: 4, kind: input, shape index: {}]
  %s5 = inlined_call_operand.vmem [shape: f32[24,48], index: 5, kind: input, shape index: {}]
  %s6 = inlined_call_operand.vmem [shape: f32[24,1], index: 6, kind: input, shape index: {}]
  %s7 = inlined_call_operand.<no memory space> [shape: f32[1,1], index: 7, kind: input, shape index: {}]
  %s8 = inlined_call_operand.vmem [shape: f32[24,8], index: 8, kind: input, shape index: {}]
  %s9 = inlined_call_operand.vmem [shape: f32[24,1], index: 9, kind: input, shape index: {}]
  %s10 = inlined_call_operand.hbm [shape: f32[24,1024], index: 10, kind: output, shape index: {}]
  %s11 = sld [smem:[#allocation0]]
  $region77: #{tpu_custom_call.1} parent=0
    _
  %s13 = ssub.s32 1, %s11
  %s14 = scalar_select 0, %s13, %s11
  %15 = sst [smem:[#allocation2]] %s4
  %16 = sst [smem:[#allocation3]] %s7
  $region1: #{tpu_custom_call.1} parent=0
    #allocation4 [shape = 'u8[32768]{0}', space=vmem, size = 0x8000, scoped, tag = 'input window, operand 0']
    #allocation5 [shape = 's32[2]{0}', space=sflag, size = 0x8, scoped, tag = 'scoped memory for tpu_custom_call.1']
    #allocation6 [shape = 's32[2]{0}', space=sflag, size = 0x8, scoped, tag = 'scoped memory for tpu_custom_call.1']
    #allocation7 [shape = 'u8[98304]{0}', space=vmem, size = 0x18000, scoped, tag = 'output window, operand 0']
    %17 = vsyncpa [#allocation5], 0
    %s18 = scalar_lea.sflag [#allocation5], 1
    %19 = vsyncpa %s18, 0
    %20 = vsyncpa [#allocation6], 0
    %s21 = scalar_lea.sflag [#allocation6], 1
    %22 = vsyncpa %s21, 0
    loop: start=0, step=1, limit=4
    $region2: #{tpu_custom_call.1} parent=1 // loop_pre_header
      _
    $region3: #{tpu_custom_call.1} parent=1 // loop_header
      %s24 = sphi 0, %s28
      %p25 = scmp.ge.s32.totalorder %s24, 4
      %s34 = sphi 0, %s36
      %s37 = sphi 0, %s34
      %s38 = sphi 0, %s37
      %s54 = sphi 0, %s38
      %s58 = sphi 0, %s58
      %s60 = sphi 0, %s58
      %s61 = sphi 0, %s60
      %s75 = sphi 0, %s61
      %s79 = sphi 0, %s79
      %s81 = sphi 0, %s79
      %s82 = sphi 0, %s81
      %s96 = sphi 0, %s82
      %s100 = sphi 0, %s100
      %s102 = sphi 0, %s100
      %s103 = sphi 0, %s102
      %s117 = sphi 0, %s103
      %s121 = sphi 0, %s121
      %s123 = sphi 0, %s121
      %s124 = sphi 0, %s123
      %s138 = sphi 0, %s124
      %s142 = sphi 0, %s142
      %s144 = sphi 0, %s142
      %s145 = sphi 0, %s144
      %s159 = sphi 0, %s145
      %s163 = sphi 0, %s163
      %s165 = sphi 0, %s163
      %s166 = sphi 0, %s165
      %s180 = sphi 0, %s166
      %s184 = sphi 0, %s184
      %s186 = sphi 0, %s184
      %s187 = sphi 0, %s186
      %s201 = sphi 0, %s187
      %s205 = sphi 0, %s205
      %s207 = sphi 0, %s205
      %s208 = sphi 0, %s207
      %s222 = sphi 0, %s208
      %s226 = sphi 0, %s226
      %s228 = sphi 0, %s226
      %s229 = sphi 0, %s228
      %s243 = sphi 0, %s229
      %s249 = sphi 0, %s251
      %s252 = sphi 0, %s249
      %s253 = sphi 0, %s252
      %s269 = sphi 0, %s253
    $region4: #{tpu_custom_call.1} parent=1 // loop_header_branch
      %27 = sbr.rel (%p25) target = $region8
    $region5: #{tpu_custom_call.1} parent=1 // loop_body
      %s29 = ssub.s32 %s24, 1
      %s30 = ssub.s32 %s24, 2
      %s31 = sadd.s32 %s24, 1
      %s32 = ssub.s32 %s24, %s31
      %p33 = scmp.eq.s32.totalorder %s32, 0
      %s35 = sadd.s32 %s34, 1
      %s36 = scalar_select %p33, %s34, %s35
      %p39 = pneg %p33
      %p40 = scmp.eq.s32.totalorder %s24, 1
      %p41 = por %p39, %p40
      %p42 = scmp.ne.s32.totalorder %s34, %s37
      %p43 = scmp.eq.s32.totalorder %s24, 0
      %p44 = por %p42, %p43
      %p45 = scmp.ne.s32.totalorder %s34, %s37
      %p46 = scmp.eq.s32.totalorder %s29, 1
      %p47 = por %p45, %p46
      %p48 = scmp.ne.s32.totalorder %s37, %s38
      %p49 = scmp.eq.s32.totalorder %s29, 0
      %p50 = por %p48, %p49
      %p51 = scmp.ne.s32.totalorder %s37, %s38
      %p52 = scmp.eq.s32.totalorder %s30, 1
      %p53 = por %p51, %p52
      %p55 = scmp.ne.s32.totalorder %s38, %s54
      %p56 = scmp.eq.s32.totalorder %s30, 0
      %p57 = por %p55, %p56
      %s59 = sadd.s32 %s58, 1
      %p62 = scmp.eq.s32.totalorder %s24, 1
      %p63 = scmp.ne.s32.totalorder %s58, %s60
      %p64 = scmp.eq.s32.totalorder %s24, 0
      %p65 = por %p63, %p64
      %p66 = scmp.ne.s32.totalorder %s58, %s60
      %p67 = scmp.eq.s32.totalorder %s29, 1
      %p68 = por %p66, %p67
      %p69 = scmp.ne.s32.totalorder %s60, %s61
      %p70 = scmp.eq.s32.totalorder %s29, 0
      %p71 = por %p69, %p70
      %p72 = scmp.ne.s32.totalorder %s60, %s61
      %p73 = scmp.eq.s32.totalorder %s30, 1
      %p74 = por %p72, %p73
      %p76 = scmp.ne.s32.totalorder %s61, %s75
      %p77 = scmp.eq.s32.totalorder %s30, 0
      %p78 = por %p76, %p77
      %s80 = sadd.s32 %s79, 1
      %p83 = scmp.eq.s32.totalorder %s24, 1
      %p84 = scmp.ne.s32.totalorder %s79, %s81
      %p85 = scmp.eq.s32.totalorder %s24, 0
      %p86 = por %p84, %p85
      %p87 = scmp.ne.s32.totalorder %s79, %s81
      %p88 = scmp.eq.s32.totalorder %s29, 1
      %p89 = por %p87, %p88
      %p90 = scmp.ne.s32.totalorder %s81, %s82
      %p91 = scmp.eq.s32.totalorder %s29, 0
      %p92 = por %p90, %p91
      %p93 = scmp.ne.s32.totalorder %s81, %s82
      %p94 = scmp.eq.s32.totalorder %s30, 1
      %p95 = por %p93, %p94
      %p97 = scmp.ne.s32.totalorder %s82, %s96
      %p98 = scmp.eq.s32.totalorder %s30, 0
      %p99 = por %p97, %p98
      %s101 = sadd.s32 %s100, 1
      %p104 = scmp.eq.s32.totalorder %s24, 1
      %p105 = scmp.ne.s32.totalorder %s100, %s102
      %p106 = scmp.eq.s32.totalorder %s24, 0
      %p107 = por %p105, %p106
      %p108 = scmp.ne.s32.totalorder %s100, %s102
      %p109 = scmp.eq.s32.totalorder %s29, 1
      %p110 = por %p108, %p109
      %p111 = scmp.ne.s32.totalorder %s102, %s103
      %p112 = scmp.eq.s32.totalorder %s29, 0
      %p113 = por %p111, %p112
      %p114 = scmp.ne.s32.totalorder %s102, %s103
      %p115 = scmp.eq.s32.totalorder %s30, 1
      %p116 = por %p114, %p115
      %p118 = scmp.ne.s32.totalorder %s103, %s117
      %p119 = scmp.eq.s32.totalorder %s30, 0
      %p120 = por %p118, %p119
      %s122 = sadd.s32 %s121, 1
      %p125 = scmp.eq.s32.totalorder %s24, 1
      %p126 = scmp.ne.s32.totalorder %s121, %s123
      %p127 = scmp.eq.s32.totalorder %s24, 0
      %p128 = por %p126, %p127
      %p129 = scmp.ne.s32.totalorder %s121, %s123
      %p130 = scmp.eq.s32.totalorder %s29, 1
      %p131 = por %p129, %p130
      %p132 = scmp.ne.s32.totalorder %s123, %s124
      %p133 = scmp.eq.s32.totalorder %s29, 0
      %p134 = por %p132, %p133
      %p135 = scmp.ne.s32.totalorder %s123, %s124
      %p136 = scmp.eq.s32.totalorder %s30, 1
      %p137 = por %p135, %p136
      %p139 = scmp.ne.s32.totalorder %s124, %s138
      %p140 = scmp.eq.s32.totalorder %s30, 0
      %p141 = por %p139, %p140
      %s143 = sadd.s32 %s142, 1
      %p146 = scmp.eq.s32.totalorder %s24, 1
      %p147 = scmp.ne.s32.totalorder %s142, %s144
      %p148 = scmp.eq.s32.totalorder %s24, 0
      %p149 = por %p147, %p148
      %p150 = scmp.ne.s32.totalorder %s142, %s144
      %p151 = scmp.eq.s32.totalorder %s29, 1
      %p152 = por %p150, %p151
      %p153 = scmp.ne.s32.totalorder %s144, %s145
      %p154 = scmp.eq.s32.totalorder %s29, 0
      %p155 = por %p153, %p154
      %p156 = scmp.ne.s32.totalorder %s144, %s145
      %p157 = scmp.eq.s32.totalorder %s30, 1
      %p158 = por %p156, %p157
      %p160 = scmp.ne.s32.totalorder %s145, %s159
      %p161 = scmp.eq.s32.totalorder %s30, 0
      %p162 = por %p160, %p161
      %s164 = sadd.s32 %s163, 1
      %p167 = scmp.eq.s32.totalorder %s24, 1
      %p168 = scmp.ne.s32.totalorder %s163, %s165
      %p169 = scmp.eq.s32.totalorder %s24, 0
      %p170 = por %p168, %p169
      %p171 = scmp.ne.s32.totalorder %s163, %s165
      %p172 = scmp.eq.s32.totalorder %s29, 1
      %p173 = por %p171, %p172
      %p174 = scmp.ne.s32.totalorder %s165, %s166
      %p175 = scmp.eq.s32.totalorder %s29, 0
      %p176 = por %p174, %p175
      %p177 = scmp.ne.s32.totalorder %s165, %s166
      %p178 = scmp.eq.s32.totalorder %s30, 1
      %p179 = por %p177, %p178
      %p181 = scmp.ne.s32.totalorder %s166, %s180
      %p182 = scmp.eq.s32.totalorder %s30, 0
      %p183 = por %p181, %p182
      %s185 = sadd.s32 %s184, 1
      %p188 = scmp.eq.s32.totalorder %s24, 1
      %p189 = scmp.ne.s32.totalorder %s184, %s186
      %p190 = scmp.eq.s32.totalorder %s24, 0
      %p191 = por %p189, %p190
      %p192 = scmp.ne.s32.totalorder %s184, %s186
      %p193 = scmp.eq.s32.totalorder %s29, 1
      %p194 = por %p192, %p193
      %p195 = scmp.ne.s32.totalorder %s186, %s187
      %p196 = scmp.eq.s32.totalorder %s29, 0
      %p197 = por %p195, %p196
      %p198 = scmp.ne.s32.totalorder %s186, %s187
      %p199 = scmp.eq.s32.totalorder %s30, 1
      %p200 = por %p198, %p199
      %p202 = scmp.ne.s32.totalorder %s187, %s201
      %p203 = scmp.eq.s32.totalorder %s30, 0
      %p204 = por %p202, %p203
      %s206 = sadd.s32 %s205, 1
      %p209 = scmp.eq.s32.totalorder %s24, 1
      %p210 = scmp.ne.s32.totalorder %s205, %s207
      %p211 = scmp.eq.s32.totalorder %s24, 0
      %p212 = por %p210, %p211
      %p213 = scmp.ne.s32.totalorder %s205, %s207
      %p214 = scmp.eq.s32.totalorder %s29, 1
      %p215 = por %p213, %p214
      %p216 = scmp.ne.s32.totalorder %s207, %s208
      %p217 = scmp.eq.s32.totalorder %s29, 0
      %p218 = por %p216, %p217
      %p219 = scmp.ne.s32.totalorder %s207, %s208
      %p220 = scmp.eq.s32.totalorder %s30, 1
      %p221 = por %p219, %p220
      %p223 = scmp.ne.s32.totalorder %s208, %s222
      %p224 = scmp.eq.s32.totalorder %s30, 0
      %p225 = por %p223, %p224
      %s227 = sadd.s32 %s226, 1
      %p230 = scmp.eq.s32.totalorder %s24, 1
      %p231 = scmp.ne.s32.totalorder %s226, %s228
      %p232 = scmp.eq.s32.totalorder %s24, 0
      %p233 = por %p231, %p232
      %p234 = scmp.ne.s32.totalorder %s226, %s228
      %p235 = scmp.eq.s32.totalorder %s29, 1
      %p236 = por %p234, %p235
      %p237 = scmp.ne.s32.totalorder %s228, %s229
      %p238 = scmp.eq.s32.totalorder %s29, 0
      %p239 = por %p237, %p238
      %p240 = scmp.ne.s32.totalorder %s228, %s229
      %p241 = scmp.eq.s32.totalorder %s30, 1
      %p242 = por %p240, %p241
      %p244 = scmp.ne.s32.totalorder %s229, %s243
      %p245 = scmp.eq.s32.totalorder %s30, 0
      %p246 = por %p244, %p245
      %s247 = ssub.s32 %s24, %s31
      %p248 = scmp.eq.s32.totalorder %s247, 0
      %s250 = sadd.s32 %s249, 1
      %s251 = scalar_select %p248, %s249, %s250
      %p254 = pneg %p248
      %p255 = scmp.eq.s32.totalorder %s24, 1
      %p256 = por %p254, %p255
      %p257 = scmp.ne.s32.totalorder %s249, %s252
      %p258 = scmp.eq.s32.totalorder %s24, 0
      %p259 = por %p257, %p258
      %p260 = scmp.ne.s32.totalorder %s249, %s252
      %p261 = scmp.eq.s32.totalorder %s29, 1
      %p262 = por %p260, %p261
      %p263 = scmp.ne.s32.totalorder %s252, %s253
      %p264 = scmp.eq.s32.totalorder %s29, 0
      %p265 = por %p263, %p264
      %p266 = scmp.ne.s32.totalorder %s252, %s253
      %p267 = scmp.eq.s32.totalorder %s30, 1
      %p268 = por %p266, %p267
      %p270 = scmp.ne.s32.totalorder %s253, %s269
      %p271 = scmp.eq.s32.totalorder %s30, 0
      %p272 = por %p270, %p271
      %p273 = scmp.le.s32.totalorder 1, %s24
      %p274 = scmp.lt.s32.totalorder %s24, 3
      %p275 = pnand %p273, %p274
      %p276 = pneg %p275
      // Predicated region
      $region9: #{tpu_custom_call.1} parent=5 // pred_check
        _
      $region10: #{tpu_custom_call.1} parent=5 // pred_check_branch
        %278 = sbr.rel (%p275) target = $region12
      $region11: #{tpu_custom_call.1} parent=5 // pred_region
        %s279 = ssub.s32 %s24, 1
        // Predicated region
        $region13: #{tpu_custom_call.1} parent=11 // pred_check
          %p280 = pneg %p71
        $region14: #{tpu_custom_call.1} parent=11 // pred_check_branch
          %282 = sbr.rel (%p280) target = $region16
        $region15: #{tpu_custom_call.1} parent=11 // pred_region
          _
        $region16: #{tpu_custom_call.1} parent=11 // pred_fallthru
          _
        // Predicated region
        $region17: #{tpu_custom_call.1} parent=11 // pred_check
          %p283 = pneg %p92
        $region18: #{tpu_custom_call.1} parent=11 // pred_check_branch
          %285 = sbr.rel (%p283) target = $region20
        $region19: #{tpu_custom_call.1} parent=11 // pred_region
          _
        $region20: #{tpu_custom_call.1} parent=11 // pred_fallthru
          _
        // Predicated region
        $region21: #{tpu_custom_call.1} parent=11 // pred_check
          %p286 = pneg %p113
        $region22: #{tpu_custom_call.1} parent=11 // pred_check_branch
          %288 = sbr.rel (%p286) target = $region24
        $region23: #{tpu_custom_call.1} parent=11 // pred_region
          _
        $region24: #{tpu_custom_call.1} parent=11 // pred_fallthru
          _
        // Predicated region
        $region25: #{tpu_custom_call.1} parent=11 // pred_check
          %p289 = pneg %p134
        $region26: #{tpu_custom_call.1} parent=11 // pred_check_branch
          %291 = sbr.rel (%p289) target = $region28
        $region27: #{tpu_custom_call.1} parent=11 // pred_region
          _
        $region28: #{tpu_custom_call.1} parent=11 // pred_fallthru
          _
        // Predicated region
        $region29: #{tpu_custom_call.1} parent=11 // pred_check
          %p292 = pneg %p155
        $region30: #{tpu_custom_call.1} parent=11 // pred_check_branch
          %294 = sbr.rel (%p292) target = $region32
        $region31: #{tpu_custom_call.1} parent=11 // pred_region
          _
        $region32: #{tpu_custom_call.1} parent=11 // pred_fallthru
          _
        // Predicated region
        $region33: #{tpu_custom_call.1} parent=11 // pred_check
          %p295 = pneg %p176
        $region34: #{tpu_custom_call.1} parent=11 // pred_check_branch
          %297 = sbr.rel (%p295) target = $region36
        $region35: #{tpu_custom_call.1} parent=11 // pred_region
          _
        $region36: #{tpu_custom_call.1} parent=11 // pred_fallthru
          _
        // Predicated region
        $region37: #{tpu_custom_call.1} parent=11 // pred_check
          %p298 = pneg %p197
        $region38: #{tpu_custom_call.1} parent=11 // pred_check_branch
          %300 = sbr.rel (%p298) target = $region40
        $region39: #{tpu_custom_call.1} parent=11 // pred_region
          _
        $region40: #{tpu_custom_call.1} parent=11 // pred_fallthru
          _
        // Predicated region
        $region41: #{tpu_custom_call.1} parent=11 // pred_check
          %p301 = pneg %p218
        $region42: #{tpu_custom_call.1} parent=11 // pred_check_branch
          %303 = sbr.rel (%p301) target = $region44
        $region43: #{tpu_custom_call.1} parent=11 // pred_region
          _
        $region44: #{tpu_custom_call.1} parent=11 // pred_fallthru
          _
        // Predicated region
        $region45: #{tpu_custom_call.1} parent=11 // pred_check
          %p304 = pneg %p239
        $region46: #{tpu_custom_call.1} parent=11 // pred_check_branch
          %306 = sbr.rel (%p304) target = $region48
        $region47: #{tpu_custom_call.1} parent=11 // pred_region
          _
        $region48: #{tpu_custom_call.1} parent=11 // pred_fallthru
          _
      $region12: #{tpu_custom_call.1} parent=5 // pred_fallthru
        _
      %p307 = scmp.lt.s32.totalorder %s24, 2
      // Predicated region
      $region49: #{tpu_custom_call.1} parent=5 // pred_check
        %p308 = pneg %p307
      $region50: #{tpu_custom_call.1} parent=5 // pred_check_branch
        %310 = sbr.rel (%p308) target = $region52
      $region51: #{tpu_custom_call.1} parent=5 // pred_region
        // Predicated region
        $region53: #{tpu_custom_call.1} parent=51 // pred_check
          %p311 = pneg %p44
        $region54: #{tpu_custom_call.1} parent=51 // pred_check_branch
          %313 = sbr.rel (%p311) target = $region56
        $region55: #{tpu_custom_call.1} parent=51 // pred_region
          %s314 = sand.u32 %s34, 1
          %s315 = scalar_lea.sflag [#allocation5], %s314
          %s316 = sand.u32 %s34, 1
          %s317 = smul.addr %s316, 32
          %s318 = scalar_lea.vmem [#allocation4], %s317
          %s319 = smul.u32 4, %s24
          %321 = vsyncadd %s315, 0
          %s322 = smul.addr %s319, 8
          %s323 = scalar_lea.hbm %s0, %s322
          %s325 = sshll.u32 %s323, 4
          %s326 = int_to_ptr.hbm [resolvable:$true] %s325
          %s327 = sshll.u32 %s318, 4
          %s328 = int_to_ptr.vmem [resolvable:$true] %s327
          %330 = dma.hbm_to_vmem [thread:$0]  %s326, 512, %s328, %s315
        $region56: #{tpu_custom_call.1} parent=51 // pred_fallthru
          _
      $region52: #{tpu_custom_call.1} parent=5 // pred_fallthru
        _
      %p331 = scmp.le.s32.totalorder 1, %s24
      %p332 = scmp.lt.s32.totalorder %s24, 3
      %p333 = pnand %p331, %p332
      %p334 = pneg %p333
      // Predicated region
      $region57: #{tpu_custom_call.1} parent=5 // pred_check
        _
      $region58: #{tpu_custom_call.1} parent=5 // pred_check_branch
        %336 = sbr.rel (%p333) target = $region60
      $region59: #{tpu_custom_call.1} parent=5 // pred_region
        %s337 = ssub.s32 %s24, 1
        %s338 = sand.u32 %s37, 1
        %s339 = scalar_lea.sflag [#allocation5], %s338
        %s340 = sand.u32 %s37, 1
        %s341 = smul.addr %s340, 32
        %s342 = scalar_lea.vmem [#allocation4], %s341
        // Predicated region
        $region61: #{tpu_custom_call.1} parent=59 // pred_check
          %p343 = pneg %p50
        $region62: #{tpu_custom_call.1} parent=59 // pred_check_branch
          %345 = sbr.rel (%p343) target = $region64
        $region63: #{tpu_custom_call.1} parent=59 // pred_region
          %347 = dma.done %s339, 512
        $region64: #{tpu_custom_call.1} parent=59 // pred_fallthru
          _
        %s348 = sand.u32 %s37, 1
        %s349 = scalar_lea.sflag [#allocation5], %s348
        %s350 = sand.u32 %s37, 1
        %s351 = smul.addr %s350, 32
        %s352 = scalar_lea.vmem [#allocation4], %s351
        %p353 = pneg %p50
        %p354 = pneg %p47
        %p355 = pneg %p71
        %p356 = pneg %p68
        %p357 = pneg %p92
        %p358 = pneg %p89
        %p359 = pneg %p113
        %p360 = pneg %p110
        %p361 = pneg %p134
        %p362 = pneg %p131
        %p363 = pneg %p155
        %p364 = pneg %p152
        %p365 = pneg %p176
        %p366 = pneg %p173
        %p367 = pneg %p197
        %p368 = pneg %p194
        %p369 = pneg %p218
        %p370 = pneg %p215
        %p371 = pneg %p239
        %p372 = pneg %p236
        %p373 = pneg %p265
        %p374 = pneg %p262
        %s375 = sand.u32 %s252, 1
        %s376 = scalar_lea.sflag [#allocation6], %s375
        %s377 = sand.u32 %s252, 1
        %s378 = smul.addr %s377, 96
        %s379 = scalar_lea.vmem [#allocation7], %s378
        %s380 = smul.u32 4, %s29
        %s381 = smul.u32 4, %s29
        %v382 = vld [vmem:[%s342] sm:$0xff]
        %v383 = vld [vmem:[%s342 + $0x8] sm:$0xff]
        %v384 = vld [vmem:[%s342 + $0x10] sm:$0xff]
        %v385 = vld [vmem:[%s342 + $0x18] sm:$0xff]
        %v386 = vld [vmem:[%s1] sm:$0xf]
        %v387 = vld [vmem:[%s2] sm:$0xff]
        %v388 = vld [vmem:[%s2 + $0x8] sm:$0xff]
        %389 = vrot.lane.b32.xlu0 %v382, 2
        %v390 = vpop.permute.xlu0 %389
        %391 = vrot.lane.b32.xlu0 %v383, 2
        %v392 = vpop.permute.xlu0 %391
        %393 = vrot.lane.b32.xlu0 %v384, 2
        %v394 = vpop.permute.xlu0 %393
        %395 = vrot.lane.b32.xlu0 %v385, 2
        %v396 = vpop.permute.xlu0 %395
        %v397 = vlaneseq
        %v398 = vand.u32 %v397, 127
        %vm399 = vcmp.lt.s32.totalorder %v398, 2
        %v400 = vsel %vm399, %v394, %v396
        %v401 = vsel %vm399, %v392, %v394
        %v402 = vsel %vm399, %v390, %v392
        %v403 = vsel %vm399, %v396, %v390
        %404 = vrot.lane.b32.xlu0 %v382, 126
        %v405 = vpop.permute.xlu0 %404
        %406 = vrot.lane.b32.xlu0 %v383, 126
        %v407 = vpop.permute.xlu0 %406
        %408 = vrot.lane.b32.xlu0 %v384, 126
        %v409 = vpop.permute.xlu0 %408
        %410 = vrot.lane.b32.xlu0 %v385, 126
        %v411 = vpop.permute.xlu0 %410
        %vm412 = vcmp.lt.s32.totalorder %v398, 126
        %v413 = vsel %vm412, %v409, %v411
        %v414 = vsel %vm412, %v407, %v409
        %v415 = vsel %vm412, %v405, %v407
        %v416 = vsel %vm412, %v411, %v405
        %v417 = vld [vmem:[%s3] sm:$0xff]
        %v418 = vld [vmem:[%s3 + $0x8] sm:$0xff]
        %420 = vset.pattern.permute.xlu0 0
        %421 = vperm.xlu0 %420, %v417
        %v422 = vpop.permute.xlu0 %421
        %425 = vset.pattern.permute.xlu0 0
        %426 = vperm.xlu0 %425, %v418
        %v427 = vpop.permute.xlu0 %426
        %vm429 = vcmask 195584
        %v431 = vsel %vm429, %v387, 0
        %v434 = vsel %vm429, %v388, 0
        %436 = vmatpush.msra.mxu0 0.0
        %437 = vmatpush.msra.mxu0 0.0
        %438 = vmatpush.msra.mxu0 0.0
        %439 = vmatpush.msra.mxu0 0.0
        %440 = vmatpush.msra.mxu0 0.0
        %441 = vmatpush.msra.mxu0 0.0
        %442 = vmatpush.msra.mxu0 0.0
        %443 = vmatpush.msra.mxu0 0.0
        %444 = vmatpush.msra.mxu0 0.0
        %445 = vmatpush.msra.mxu0 0.0
        %446 = vmatpush.msra.mxu0 0.0
        %447 = vmatpush.msra.mxu0 0.0
        %448 = vmatpush.msra.mxu0 0.0
        %449 = vmatpush.msra.mxu0 %v415
        %450 = vmatpush.msra.mxu0 %v382
        %451 = vmatpush.msra.mxu0 %v403
        %452 = vmatmul.f32.gmra.mxu0 %v431
        %v453 = vpop.f32.mrf.mxu0
        %v454 = vadd.f32 %v422, %v453
        %455 = vmatmul.f32.gmra.mxu0 %v434
        %v456 = vpop.f32.mrf.mxu0
        %v457 = vadd.f32 %v427, %v456
        %458 = vdwg.mxu0
        %459 = vmatpush.msra.mxu0 0.0
        %460 = vmatpush.msra.mxu0 0.0
        %461 = vmatpush.msra.mxu0 0.0
        %462 = vmatpush.msra.mxu0 0.0
        %463 = vmatpush.msra.mxu0 0.0
        %464 = vmatpush.msra.mxu0 0.0
        %465 = vmatpush.msra.mxu0 0.0
        %466 = vmatpush.msra.mxu0 0.0
        %467 = vmatpush.msra.mxu0 0.0
        %468 = vmatpush.msra.mxu0 0.0
        %469 = vmatpush.msra.mxu0 0.0
        %470 = vmatpush.msra.mxu0 0.0
        %471 = vmatpush.msra.mxu0 0.0
        %472 = vmatpush.msra.mxu0 %v414
        %473 = vmatpush.msra.mxu0 %v383
        %474 = vmatpush.msra.mxu0 %v402
        %475 = vmatmul.f32.gmra.mxu0 %v431
        %v476 = vpop.f32.mrf.mxu0
        %v477 = vadd.f32 %v422, %v476
        %478 = vmatmul.f32.gmra.mxu0 %v434
        %v479 = vpop.f32.mrf.mxu0
        %v480 = vadd.f32 %v427, %v479
        %481 = vdwg.mxu0
        %482 = vmatpush.msra.mxu0 0.0
        %483 = vmatpush.msra.mxu0 0.0
        %484 = vmatpush.msra.mxu0 0.0
        %485 = vmatpush.msra.mxu0 0.0
        %486 = vmatpush.msra.mxu0 0.0
        %487 = vmatpush.msra.mxu0 0.0
        %488 = vmatpush.msra.mxu0 0.0
        %489 = vmatpush.msra.mxu0 0.0
        %490 = vmatpush.msra.mxu0 0.0
        %491 = vmatpush.msra.mxu0 0.0
        %492 = vmatpush.msra.mxu0 0.0
        %493 = vmatpush.msra.mxu0 0.0
        %494 = vmatpush.msra.mxu0 0.0
        %495 = vmatpush.msra.mxu0 %v413
        %496 = vmatpush.msra.mxu0 %v384
        %497 = vmatpush.msra.mxu0 %v401
        %498 = vmatmul.f32.gmra.mxu0 %v431
        %v499 = vpop.f32.mrf.mxu0
        %v500 = vadd.f32 %v422, %v499
        %501 = vmatmul.f32.gmra.mxu0 %v434
        %v502 = vpop.f32.mrf.mxu0
        %v503 = vadd.f32 %v427, %v502
        %504 = vdwg.mxu0
        %505 = vmatpush.msra.mxu0 0.0
        %506 = vmatpush.msra.mxu0 0.0
        %507 = vmatpush.msra.mxu0 0.0
        %508 = vmatpush.msra.mxu0 0.0
        %509 = vmatpush.msra.mxu0 0.0
        %510 = vmatpush.msra.mxu0 0.0
        %511 = vmatpush.msra.mxu0 0.0
        %512 = vmatpush.msra.mxu0 0.0
        %513 = vmatpush.msra.mxu0 0.0
        %514 = vmatpush.msra.mxu0 0.0
        %515 = vmatpush.msra.mxu0 0.0
        %516 = vmatpush.msra.mxu0 0.0
        %517 = vmatpush.msra.mxu0 0.0
        %518 = vmatpush.msra.mxu0 %v416
        %519 = vmatpush.msra.mxu0 %v385
        %520 = vmatpush.msra.mxu0 %v400
        %521 = vmatmul.f32.gmra.mxu0 %v431
        %v522 = vpop.f32.mrf.mxu0
        %v523 = vadd.f32 %v422, %v522
        %524 = vmatmul.f32.gmra.mxu0 %v434
        %v525 = vpop.f32.mrf.mxu0
        %v526 = vadd.f32 %v427, %v525
        %527 = vdwg.mxu0
        %s528 = sld [smem:[#allocation2]]
        %vm529 = vcmp.gt.f32.partialorder %v454, 0.0
        %vm530 = vcmp.gt.f32.partialorder %v477, 0.0
        %vm531 = vcmp.gt.f32.partialorder %v500, 0.0
        %vm532 = vcmp.gt.f32.partialorder %v523, 0.0
        %vm533 = vcmp.gt.f32.partialorder %v457, 0.0
        %vm534 = vcmp.gt.f32.partialorder %v480, 0.0
        %vm535 = vcmp.gt.f32.partialorder %v503, 0.0
        %vm536 = vcmp.gt.f32.partialorder %v526, 0.0
        %v537 = vstv %s528
        %v538 = vmul.f32 %v537, %v454
        %v539 = vmul.f32 %v537, %v477
        %v540 = vmul.f32 %v537, %v500
        %v541 = vmul.f32 %v537, %v523
        %v542 = vmul.f32 %v537, %v457
        %v543 = vmul.f32 %v537, %v480
        %v544 = vmul.f32 %v537, %v503
        %v545 = vmul.f32 %v537, %v526
        %v546 = vsel %vm529, %v454, %v538
        %v547 = vsel %vm530, %v477, %v539
        %v548 = vsel %vm531, %v500, %v540
        %v549 = vsel %vm532, %v523, %v541
        %v550 = vsel %vm533, %v457, %v542
        %v551 = vsel %vm534, %v480, %v543
        %v552 = vsel %vm535, %v503, %v544
        %v553 = vsel %vm536, %v526, %v545
        %v555 = vperm.slane %v386, 0
        %v556 = vperm.slane %v386, 1
        %v557 = vperm.slane %v386, 2
        %v558 = vperm.slane %v386, 3
        %v563 = vmul.f32 %v546, %v555
        %v564 = vmul.f32 %v547, %v556
        %v565 = vmul.f32 %v548, %v557
        %v566 = vmul.f32 %v549, %v558
        %v567 = vmul.f32 %v550, %v555
        %v568 = vmul.f32 %v551, %v556
        %v569 = vmul.f32 %v552, %v557
        %v570 = vmul.f32 %v553, %v558
        %v571 = vld [vmem:[%s5] sm:$0xff]
        %v572 = vld [vmem:[%s5 + $0x8] sm:$0xff]
        %v573 = vld [vmem:[%s5 + $0x10] sm:$0xff]
        %574 = vrot.lane.b32.xlu0 %v563, 2
        %v575 = vpop.permute.xlu0 %574
        %576 = vrot.lane.b32.xlu0 %v567, 2
        %v577 = vpop.permute.xlu0 %576
        %578 = vrot.lane.b32.xlu0 %v564, 2
        %v579 = vpop.permute.xlu0 %578
        %580 = vrot.lane.b32.xlu0 %v568, 2
        %v581 = vpop.permute.xlu0 %580
        %582 = vrot.lane.b32.xlu0 %v565, 2
        %v583 = vpop.permute.xlu0 %582
        %584 = vrot.lane.b32.xlu0 %v569, 2
        %v585 = vpop.permute.xlu0 %584
        %586 = vrot.lane.b32.xlu0 %v566, 2
        %v587 = vpop.permute.xlu0 %586
        %588 = vrot.lane.b32.xlu0 %v570, 2
        %v589 = vpop.permute.xlu0 %588
        %v590 = vsel %vm399, %v583, %v587
        %v591 = vsel %vm399, %v585, %v589
        %v592 = vsel %vm399, %v579, %v583
        %v593 = vsel %vm399, %v581, %v585
        %v594 = vsel %vm399, %v575, %v579
        %v595 = vsel %vm399, %v577, %v581
        %v596 = vsel %vm399, %v587, %v575
        %v597 = vsel %vm399, %v589, %v577
        %598 = vrot.lane.b32.xlu0 %v563, 126
        %v599 = vpop.permute.xlu0 %598
        %600 = vrot.lane.b32.xlu0 %v567, 126
        %v601 = vpop.permute.xlu0 %600
        %602 = vrot.lane.b32.xlu0 %v564, 126
        %v603 = vpop.permute.xlu0 %602
        %604 = vrot.lane.b32.xlu0 %v568, 126
        %v605 = vpop.permute.xlu0 %604
        %606 = vrot.lane.b32.xlu0 %v565, 126
        %v607 = vpop.permute.xlu0 %606
        %608 = vrot.lane.b32.xlu0 %v569, 126
        %v609 = vpop.permute.xlu0 %608
        %610 = vrot.lane.b32.xlu0 %v566, 126
        %v611 = vpop.permute.xlu0 %610
        %612 = vrot.lane.b32.xlu0 %v570, 126
        %v613 = vpop.permute.xlu0 %612
        %v614 = vsel %vm412, %v607, %v611
        %v615 = vsel %vm412, %v609, %v613
        %v616 = vsel %vm412, %v603, %v607
        %v617 = vsel %vm412, %v605, %v609
        %v618 = vsel %vm412, %v599, %v603
        %v619 = vsel %vm412, %v601, %v605
        %v620 = vsel %vm412, %v611, %v599
        %v621 = vsel %vm412, %v613, %v601
        %v622 = vld [vmem:[%s6] sm:$0xff]
        %v623 = vld [vmem:[%s6 + $0x8] sm:$0xff]
        %v624 = vld [vmem:[%s6 + $0x10] sm:$0xff]
        %626 = vset.pattern.permute.xlu0 0
        %627 = vperm.xlu0 %626, %v622
        %v628 = vpop.permute.xlu0 %627
        %631 = vset.pattern.permute.xlu0 0
        %632 = vperm.xlu0 %631, %v623
        %v633 = vpop.permute.xlu0 %632
        %636 = vset.pattern.permute.xlu0 0
        %637 = vperm.xlu0 %636, %v624
        %v638 = vpop.permute.xlu0 %637
        %vm640 = vcmask 392192
        %v642 = vsel %vm640, %v571, 0
        %v645 = vsel %vm640, %v572, 0
        %v648 = vsel %vm640, %v573, 0
        %650 = vmatpush.msra.mxu0 0.0
        %651 = vmatpush.msra.mxu0 0.0
        %652 = vmatpush.msra.mxu0 0.0
        %653 = vmatpush.msra.mxu0 0.0
        %654 = vmatpush.msra.mxu0 0.0
        %655 = vmatpush.msra.mxu0 0.0
        %656 = vmatpush.msra.mxu0 0.0
        %657 = vmatpush.msra.mxu0 0.0
        %658 = vmatpush.msra.mxu0 0.0
        %659 = vmatpush.msra.mxu0 0.0
        %660 = vmatpush.msra.mxu0 %v619
        %661 = vmatpush.msra.mxu0 %v618
        %662 = vmatpush.msra.mxu0 %v567
        %663 = vmatpush.msra.mxu0 %v563
        %664 = vmatpush.msra.mxu0 %v597
        %665 = vmatpush.msra.mxu0 %v596
        %666 = vmatmul.f32.gmra.mxu0 %v642
        %v667 = vpop.f32.mrf.mxu0
        %v668 = vadd.f32 %v628, %v667
        %669 = vmatmul.f32.gmra.mxu0 %v645
        %v670 = vpop.f32.mrf.mxu0
        %v671 = vadd.f32 %v633, %v670
        %672 = vmatmul.f32.gmra.mxu0 %v648
        %v673 = vpop.f32.mrf.mxu0
        %v674 = vadd.f32 %v638, %v673
        %675 = vdwg.mxu0
        %676 = vmatpush.msra.mxu0 0.0
        %677 = vmatpush.msra.mxu0 0.0
        %678 = vmatpush.msra.mxu0 0.0
        %679 = vmatpush.msra.mxu0 0.0
        %680 = vmatpush.msra.mxu0 0.0
        %681 = vmatpush.msra.mxu0 0.0
        %682 = vmatpush.msra.mxu0 0.0
        %683 = vmatpush.msra.mxu0 0.0
        %684 = vmatpush.msra.mxu0 0.0
        %685 = vmatpush.msra.mxu0 0.0
        %686 = vmatpush.msra.mxu0 %v617
        %687 = vmatpush.msra.mxu0 %v616
        %688 = vmatpush.msra.mxu0 %v568
        %689 = vmatpush.msra.mxu0 %v564
        %690 = vmatpush.msra.mxu0 %v595
        %691 = vmatpush.msra.mxu0 %v594
        %692 = vmatmul.f32.gmra.mxu0 %v642
        %v693 = vpop.f32.mrf.mxu0
        %v694 = vadd.f32 %v628, %v693
        %695 = vmatmul.f32.gmra.mxu0 %v645
        %v696 = vpop.f32.mrf.mxu0
        %v697 = vadd.f32 %v633, %v696
        %698 = vmatmul.f32.gmra.mxu0 %v648
        %v699 = vpop.f32.mrf.mxu0
        %v700 = vadd.f32 %v638, %v699
        %701 = vdwg.mxu0
        %702 = vmatpush.msra.mxu0 0.0
        %703 = vmatpush.msra.mxu0 0.0
        %704 = vmatpush.msra.mxu0 0.0
        %705 = vmatpush.msra.mxu0 0.0
        %706 = vmatpush.msra.mxu0 0.0
        %707 = vmatpush.msra.mxu0 0.0
        %708 = vmatpush.msra.mxu0 0.0
        %709 = vmatpush.msra.mxu0 0.0
        %710 = vmatpush.msra.mxu0 0.0
        %711 = vmatpush.msra.mxu0 0.0
        %712 = vmatpush.msra.mxu0 %v615
        %713 = vmatpush.msra.mxu0 %v614
        %714 = vmatpush.msra.mxu0 %v569
        %715 = vmatpush.msra.mxu0 %v565
        %716 = vmatpush.msra.mxu0 %v593
        %717 = vmatpush.msra.mxu0 %v592
        %718 = vmatmul.f32.gmra.mxu0 %v642
        %v719 = vpop.f32.mrf.mxu0
        %v720 = vadd.f32 %v628, %v719
        %721 = vmatmul.f32.gmra.mxu0 %v645
        %v722 = vpop.f32.mrf.mxu0
        %v723 = vadd.f32 %v633, %v722
        %724 = vmatmul.f32.gmra.mxu0 %v648
        %v725 = vpop.f32.mrf.mxu0
        %v726 = vadd.f32 %v638, %v725
        %727 = vdwg.mxu0
        %728 = vmatpush.msra.mxu0 0.0
        %729 = vmatpush.msra.mxu0 0.0
        %730 = vmatpush.msra.mxu0 0.0
        %731 = vmatpush.msra.mxu0 0.0
        %732 = vmatpush.msra.mxu0 0.0
        %733 = vmatpush.msra.mxu0 0.0
        %734 = vmatpush.msra.mxu0 0.0
        %735 = vmatpush.msra.mxu0 0.0
        %736 = vmatpush.msra.mxu0 0.0
        %737 = vmatpush.msra.mxu0 0.0
        %738 = vmatpush.msra.mxu0 %v621
        %739 = vmatpush.msra.mxu0 %v620
        %740 = vmatpush.msra.mxu0 %v570
        %741 = vmatpush.msra.mxu0 %v566
        %742 = vmatpush.msra.mxu0 %v591
        %743 = vmatpush.msra.mxu0 %v590
        %744 = vmatmul.f32.gmra.mxu0 %v642
        %v745 = vpop.f32.mrf.mxu0
        %v746 = vadd.f32 %v628, %v745
        %747 = vmatmul.f32.gmra.mxu0 %v645
        %v748 = vpop.f32.mrf.mxu0
        %v749 = vadd.f32 %v633, %v748
        %750 = vmatmul.f32.gmra.mxu0 %v648
        %v751 = vpop.f32.mrf.mxu0
        %v752 = vadd.f32 %v638, %v751
        %753 = vdwg.mxu0
        %s754 = sld [smem:[#allocation3]]
        %vm755 = vcmp.gt.f32.partialorder %v668, 0.0
        %vm756 = vcmp.gt.f32.partialorder %v694, 0.0
        %vm757 = vcmp.gt.f32.partialorder %v720, 0.0
        %vm758 = vcmp.gt.f32.partialorder %v746, 0.0
        %vm759 = vcmp.gt.f32.partialorder %v671, 0.0
        %vm760 = vcmp.gt.f32.partialorder %v697, 0.0
        %vm761 = vcmp.gt.f32.partialorder %v723, 0.0
        %vm762 = vcmp.gt.f32.partialorder %v749, 0.0
        %vm763 = vcmp.gt.f32.partialorder %v674, 0.0
        %vm764 = vcmp.gt.f32.partialorder %v700, 0.0
        %vm765 = vcmp.gt.f32.partialorder %v726, 0.0
        %vm766 = vcmp.gt.f32.partialorder %v752, 0.0
        %v767 = vstv %s754
        %v768 = vmul.f32 %v767, %v668
        %v769 = vmul.f32 %v767, %v694
        %v770 = vmul.f32 %v767, %v720
        %v771 = vmul.f32 %v767, %v746
        %v772 = vmul.f32 %v767, %v671
        %v773 = vmul.f32 %v767, %v697
        %v774 = vmul.f32 %v767, %v723
        %v775 = vmul.f32 %v767, %v749
        %v776 = vmul.f32 %v767, %v674
        %v777 = vmul.f32 %v767, %v700
        %v778 = vmul.f32 %v767, %v726
        %v779 = vmul.f32 %v767, %v752
        %v780 = vsel %vm755, %v668, %v768
        %v781 = vsel %vm756, %v694, %v769
        %v782 = vsel %vm757, %v720, %v770
        %v783 = vsel %vm758, %v746, %v771
        %v784 = vsel %vm759, %v671, %v772
        %v785 = vsel %vm760, %v697, %v773
        %v786 = vsel %vm761, %v723, %v774
        %v787 = vsel %vm762, %v749, %v775
        %v788 = vsel %vm763, %v674, %v776
        %v789 = vsel %vm764, %v700, %v777
        %v790 = vsel %vm765, %v726, %v778
        %v791 = vsel %vm766, %v752, %v779
        %v792 = vld [vmem:[%s8] sm:$0xff]
        %v793 = vld [vmem:[%s8 + $0x8] sm:$0xff]
        %v794 = vld [vmem:[%s8 + $0x10] sm:$0xff]
        %v795 = vld [vmem:[%s9] sm:$0xff]
        %v796 = vld [vmem:[%s9 + $0x8] sm:$0xff]
        %v797 = vld [vmem:[%s9 + $0x10] sm:$0xff]
        %799 = vset.pattern.permute.xlu0 0
        %800 = vperm.xlu0 %799, %v795
        %v801 = vpop.permute.xlu0 %800
        %804 = vset.pattern.permute.xlu0 0
        %805 = vperm.xlu0 %804, %v796
        %v806 = vpop.permute.xlu0 %805
        %809 = vset.pattern.permute.xlu0 0
        %810 = vperm.xlu0 %809, %v797
        %v811 = vpop.permute.xlu0 %810
        %vm813 = vcmask 64512
        %v815 = vsel %vm813, %v792, 0
        %v818 = vsel %vm813, %v793, 0
        %v821 = vsel %vm813, %v794, 0
        %823 = vmatpush.msra.mxu0 0.0
        %824 = vmatpush.msra.mxu0 0.0
        %825 = vmatpush.msra.mxu0 0.0
        %826 = vmatpush.msra.mxu0 0.0
        %827 = vmatpush.msra.mxu0 0.0
        %828 = vmatpush.msra.mxu0 0.0
        %829 = vmatpush.msra.mxu0 0.0
        %830 = vmatpush.msra.mxu0 0.0
        %831 = vmatpush.msra.mxu0 0.0
        %832 = vmatpush.msra.mxu0 0.0
        %833 = vmatpush.msra.mxu0 0.0
        %834 = vmatpush.msra.mxu0 0.0
        %835 = vmatpush.msra.mxu0 0.0
        %836 = vmatpush.msra.mxu0 0.0
        %837 = vmatpush.msra.mxu0 0.0
        %838 = vmatpush.msra.mxu0 %v382
        %839 = vmatmul.f32.gmra.mxu0 %v815
        %v840 = vpop.f32.mrf.mxu0
        %v841 = vadd.f32 %v801, %v840
        %842 = vmatmul.f32.gmra.mxu0 %v818
        %v843 = vpop.f32.mrf.mxu0
        %v844 = vadd.f32 %v806, %v843
        %845 = vmatmul.f32.gmra.mxu0 %v821
        %v846 = vpop.f32.mrf.mxu0
        %v847 = vadd.f32 %v811, %v846
        %848 = vdwg.mxu0
        %849 = vmatpush.msra.mxu0 0.0
        %850 = vmatpush.msra.mxu0 0.0
        %851 = vmatpush.msra.mxu0 0.0
        %852 = vmatpush.msra.mxu0 0.0
        %853 = vmatpush.msra.mxu0 0.0
        %854 = vmatpush.msra.mxu0 0.0
        %855 = vmatpush.msra.mxu0 0.0
        %856 = vmatpush.msra.mxu0 0.0
        %857 = vmatpush.msra.mxu0 0.0
        %858 = vmatpush.msra.mxu0 0.0
        %859 = vmatpush.msra.mxu0 0.0
        %860 = vmatpush.msra.mxu0 0.0
        %861 = vmatpush.msra.mxu0 0.0
        %862 = vmatpush.msra.mxu0 0.0
        %863 = vmatpush.msra.mxu0 0.0
        %864 = vmatpush.msra.mxu0 %v383
        %865 = vmatmul.f32.gmra.mxu0 %v815
        %v866 = vpop.f32.mrf.mxu0
        %v867 = vadd.f32 %v801, %v866
        %868 = vmatmul.f32.gmra.mxu0 %v818
        %v869 = vpop.f32.mrf.mxu0
        %v870 = vadd.f32 %v806, %v869
        %871 = vmatmul.f32.gmra.mxu0 %v821
        %v872 = vpop.f32.mrf.mxu0
        %v873 = vadd.f32 %v811, %v872
        %874 = vdwg.mxu0
        %875 = vmatpush.msra.mxu0 0.0
        %876 = vmatpush.msra.mxu0 0.0
        %877 = vmatpush.msra.mxu0 0.0
        %878 = vmatpush.msra.mxu0 0.0
        %879 = vmatpush.msra.mxu0 0.0
        %880 = vmatpush.msra.mxu0 0.0
        %881 = vmatpush.msra.mxu0 0.0
        %882 = vmatpush.msra.mxu0 0.0
        %883 = vmatpush.msra.mxu0 0.0
        %884 = vmatpush.msra.mxu0 0.0
        %885 = vmatpush.msra.mxu0 0.0
        %886 = vmatpush.msra.mxu0 0.0
        %887 = vmatpush.msra.mxu0 0.0
        %888 = vmatpush.msra.mxu0 0.0
        %889 = vmatpush.msra.mxu0 0.0
        %890 = vmatpush.msra.mxu0 %v384
        %891 = vmatmul.f32.gmra.mxu0 %v815
        %v892 = vpop.f32.mrf.mxu0
        %v893 = vadd.f32 %v801, %v892
        %894 = vmatmul.f32.gmra.mxu0 %v818
        %v895 = vpop.f32.mrf.mxu0
        %v896 = vadd.f32 %v806, %v895
        %897 = vmatmul.f32.gmra.mxu0 %v821
        %v898 = vpop.f32.mrf.mxu0
        %v899 = vadd.f32 %v811, %v898
        %900 = vdwg.mxu0
        %901 = vmatpush.msra.mxu0 0.0
        %902 = vmatpush.msra.mxu0 0.0
        %903 = vmatpush.msra.mxu0 0.0
        %904 = vmatpush.msra.mxu0 0.0
        %905 = vmatpush.msra.mxu0 0.0
        %906 = vmatpush.msra.mxu0 0.0
        %907 = vmatpush.msra.mxu0 0.0
        %908 = vmatpush.msra.mxu0 0.0
        %909 = vmatpush.msra.mxu0 0.0
        %910 = vmatpush.msra.mxu0 0.0
        %911 = vmatpush.msra.mxu0 0.0
        %912 = vmatpush.msra.mxu0 0.0
        %913 = vmatpush.msra.mxu0 0.0
        %914 = vmatpush.msra.mxu0 0.0
        %915 = vmatpush.msra.mxu0 0.0
        %916 = vmatpush.msra.mxu0 %v385
        %917 = vmatmul.f32.gmra.mxu0 %v815
        %v918 = vpop.f32.mrf.mxu0
        %v919 = vadd.f32 %v801, %v918
        %920 = vmatmul.f32.gmra.mxu0 %v818
        %v921 = vpop.f32.mrf.mxu0
        %v922 = vadd.f32 %v806, %v921
        %923 = vmatmul.f32.gmra.mxu0 %v821
        %v924 = vpop.f32.mrf.mxu0
        %v925 = vadd.f32 %v811, %v924
        %926 = vdwg.mxu0
        %v927 = vadd.f32 %v780, %v841
        %v928 = vadd.f32 %v781, %v867
        %v929 = vadd.f32 %v782, %v893
        %v930 = vadd.f32 %v783, %v919
        %v931 = vadd.f32 %v784, %v844
        %v932 = vadd.f32 %v785, %v870
        %v933 = vadd.f32 %v786, %v896
        %v934 = vadd.f32 %v787, %v922
        %v935 = vadd.f32 %v788, %v847
        %v936 = vadd.f32 %v789, %v873
        %v937 = vadd.f32 %v790, %v899
        %v938 = vadd.f32 %v791, %v925
        %939 = vst [vmem:[%s379] sm:$0xff] %v927
        %940 = vst [vmem:[%s379 + $0x8] sm:$0xff] %v928
        %941 = vst [vmem:[%s379 + $0x10] sm:$0xff] %v929
        %942 = vst [vmem:[%s379 + $0x18] sm:$0xff] %v930
        %943 = vst [vmem:[%s379 + $0x20] sm:$0xff] %v931
        %944 = vst [vmem:[%s379 + $0x28] sm:$0xff] %v932
        %945 = vst [vmem:[%s379 + $0x30] sm:$0xff] %v933
        %946 = vst [vmem:[%s379 + $0x38] sm:$0xff] %v934
        %947 = vst [vmem:[%s379 + $0x40] sm:$0xff] %v935
        %948 = vst [vmem:[%s379 + $0x48] sm:$0xff] %v936
        %949 = vst [vmem:[%s379 + $0x50] sm:$0xff] %v937
        %950 = vst [vmem:[%s379 + $0x58] sm:$0xff] %v938
        %s951 = sand.u32 %s252, 1
        %s952 = scalar_lea.sflag [#allocation6], %s951
        %s953 = sand.u32 %s252, 1
        %s954 = smul.addr %s953, 96
        %s955 = scalar_lea.vmem [#allocation7], %s954
        // Predicated region
        $region65: #{tpu_custom_call.1} parent=59 // pred_check
          %p956 = pneg %p262
        $region66: #{tpu_custom_call.1} parent=59 // pred_check_branch
          %958 = sbr.rel (%p956) target = $region68
        $region67: #{tpu_custom_call.1} parent=59 // pred_region
          %s959 = smul.u32 4, %s29
          %961 = vsyncadd %s952, 0
          %s962 = smul.addr %s959, 8
          %s963 = scalar_lea.hbm %s10, %s962
          %s964 = sshll.u32 %s955, 4
          %s965 = int_to_ptr.vmem [resolvable:$true] %s964
          %s966 = sshll.u32 %s963, 4
          %s967 = int_to_ptr.hbm [resolvable:$true] %s966
          %972 = dma.vmem_to_hbm [thread:$0]  %s965, 1536, %s967, %s952, 512, 1024, 32
        $region68: #{tpu_custom_call.1} parent=59 // pred_fallthru
          _
      $region60: #{tpu_custom_call.1} parent=5 // pred_fallthru
        _
      %p973 = scmp.le.s32.totalorder 2, %s24
      // Predicated region
      $region69: #{tpu_custom_call.1} parent=5 // pred_check
        %p974 = pneg %p973
      $region70: #{tpu_custom_call.1} parent=5 // pred_check_branch
        %976 = sbr.rel (%p974) target = $region72
      $region71: #{tpu_custom_call.1} parent=5 // pred_region
        %s977 = ssub.s32 %s24, 2
        // Predicated region
        $region73: #{tpu_custom_call.1} parent=71 // pred_check
          %p978 = pneg %p268
        $region74: #{tpu_custom_call.1} parent=71 // pred_check_branch
          %980 = sbr.rel (%p978) target = $region76
        $region75: #{tpu_custom_call.1} parent=71 // pred_region
          %s981 = sand.u32 %s253, 1
          %s982 = scalar_lea.sflag [#allocation6], %s981
          %s983 = sand.u32 %s253, 1
          %s984 = smul.addr %s983, 96
          %s985 = scalar_lea.vmem [#allocation7], %s984
          %987 = dma.done %s982, 1536
        $region76: #{tpu_custom_call.1} parent=71 // pred_fallthru
          _
      $region72: #{tpu_custom_call.1} parent=5 // pred_fallthru
        _
    $region6: #{tpu_custom_call.1} parent=1 // loop_footer
      %s28 = sadd.s32 1, %s24
    $region7: #{tpu_custom_call.1} parent=1 // loop_footer_branch
      %23 = sbr.rel target = $region3
    $region8: #{tpu_custom_call.1} parent=1 // loop_exit
      _
    %988 = vsyncpa [#allocation5], 1
    %s989 = scalar_lea.sflag [#allocation5], 1
    %990 = vsyncpa %s989, 1
    %991 = vsyncpa [#allocation6], 1
    %s992 = scalar_lea.sflag [#allocation6], 1
    %993 = vsyncpa %s992, 1

</llo_original>
